<compile_context>
chip_gen: v5e
topology: v5e:2x2
jax: 0.10.0
libtpu: 0.0.40
codegen_flags: <defaults>
</compile_context>

<pallas_src>
import jax
import jax.numpy as jnp
from jax.experimental import pallas as pl
from jax.experimental.pallas import tpu as pltpu


def _round_up(n, m):
    return ((n + m - 1) // m) * m


def _round_down8(n):
    return max(8, (n // 8) * 8)


def _choose_fold(B, C):
    """Fold factor so fold*C == 128 (lane-dense) when cheaply possible."""
    if C >= 128 or C <= 0 or (128 % C) != 0:
        return 1
    f = 128 // C
    if B % f != 0:
        return 1  # avoid an HBM pad copy; fall back to the un-folded path
    return f


def _block_diag(m, fold):
    """(a, b) -> (fold*a, fold*b) block-diagonal replication (done once)."""
    if fold == 1:
        return m
    a, b = m.shape
    out = jnp.zeros((fold * a, fold * b), dtype=m.dtype)
    for i in range(fold):
        out = out.at[i * a:(i + 1) * a, i * b:(i + 1) * b].set(m)
    return out


def _se_kernel(x_ref, w1t_ref, b1_ref, w2t_ref, b2_ref, o_ref):
    # x_ref : (TB, Cf)   w1t_ref: (Cf, Hf)   b1_ref: (1, Hf) f32
    # w2t_ref: (Hf, Cf)  b2_ref : (1, Cf) f32     o_ref : (TB, Cf)
    x = x_ref[...]

    # First Linear + ReLU (MXU, f32 accumulation).
    h = jnp.dot(x, w1t_ref[...], preferred_element_type=jnp.float32)
    h = jnp.maximum(h + b1_ref[...], 0.0)

    # Second Linear (tiny (TB, Hf) intermediate cast to the weight dtype).
    s = jnp.dot(h.astype(w2t_ref.dtype), w2t_ref[...],
                preferred_element_type=jnp.float32)
    s = s + b2_ref[...]

    # sigmoid(s) == 0.5*tanh(0.5*s) + 0.5 : one EUP op per vreg instead of
    # exp + divide/reciprocal over the full (TB, Cf) tile.
    gate = 0.5 * jnp.tanh(0.5 * s) + 0.5

    # Cast the gate once; multiply in x's native dtype (no full-size f32
    # second copy of x on the hot path).
    o_ref[...] = (x * gate.astype(x.dtype)).astype(o_ref.dtype)


def prepare_se_params(w1, b1, w2, b2, param_dtype=None, fold=1):
    """Transpose / block-diagonal / bias-tile glue, done ONCE at load time.

    w1: (H, C), b1: (H,), w2: (C, H), b2: (C,)  (PyTorch nn.Linear layout).
    With fold > 1, `fold` consecutive rows of x can be folded into the lane
    dim; the block-diagonal structure keeps the folded rows independent.
    """
    if param_dtype is None:
        param_dtype = w1.dtype
    w1t = jnp.transpose(w1).astype(param_dtype)    # (C, H)
    w2t = jnp.transpose(w2).astype(param_dtype)    # (H, C)
    b1r = b1.reshape(1, -1).astype(jnp.float32)    # (1, H)
    b2r = b2.reshape(1, -1).astype(jnp.float32)    # (1, C)
    if fold > 1:
        w1t = _block_diag(w1t, fold)               # (fold*C, fold*H)
        w2t = _block_diag(w2t, fold)               # (fold*H, fold*C)
        b1r = jnp.tile(b1r, (1, fold))             # (1, fold*H)
        b2r = jnp.tile(b2r, (1, fold))             # (1, fold*C)
    return w1t, b1r, w2t, b2r


def se_block_prepared(x, w1t, b1r, w2t, b2r, tb=None, core_parallel=False):
    """x: (B, Cf). Batch-tiled SE block; weights stay resident in VMEM."""
    B, C = x.shape
    H = w1t.shape[1]
    itemsize = jnp.dtype(x.dtype).itemsize

    if tb is None:
        # Byte-budgeted tile: ~2 MiB of x per grid step. In+out double-buffers
        # then total ~8 MiB — inside v5e's 16 MiB scoped-VMEM default (the
        # tightest), and large enough to amortize the ~0.35 µs per-step
        # overhead against v7x's ~3.2 TB/s HBM.
        tb = (2 << 20) // max(1, C * itemsize)
    # Hard cap: 4 tile-sized buffers (x + out, double-buffered) <= ~12 MiB.
    tb_cap = _round_down8((12 << 20) // max(1, 4 * C * itemsize))
    tb = _round_down8(min(int(tb), tb_cap))
    tb = min(tb, _round_up(B, 8))
    tb = max(8, tb)

    grid = (pl.cdiv(B, tb),)

    # Batch tiles are independent. Default "parallel" is harmless everywhere;
    # CORE_PARALLEL explicitly splits grid steps across v7x's 2 TensorCores
    # (a single TC cannot saturate 3.2 TB/s on this memory-bound kernel).
    sem = (pltpu.CORE_PARALLEL,) if core_parallel else ("parallel",)

    return pl.pallas_call(
        _se_kernel,
        out_shape=jax.ShapeDtypeStruct((B, C), x.dtype),
        grid=grid,
        in_specs=[
            pl.BlockSpec((tb, C), lambda i: (i, 0)),   # x tile (pipelined)
            pl.BlockSpec((C, H), lambda i: (0, 0)),    # resident weight
            pl.BlockSpec((1, H), lambda i: (0, 0)),    # resident bias
            pl.BlockSpec((H, C), lambda i: (0, 0)),    # resident weight
            pl.BlockSpec((1, C), lambda i: (0, 0)),    # resident bias
        ],
        out_specs=pl.BlockSpec((tb, C), lambda i: (i, 0)),
        compiler_params=pltpu.CompilerParams(dimension_semantics=sem),
    )(x, w1t, b1r, w2t, b2r)


def se_block(x, w1, b1, w2, b2, tb=None, core_parallel=False):
    """Convenience wrapper taking raw PyTorch-layout params. x: (B, C)."""
    B, C = x.shape
    fold = _choose_fold(B, C)
    w1t, b1r, w2t, b2r = prepare_se_params(
        w1, b1, w2, b2, param_dtype=x.dtype, fold=fold)
    # Row-major (B, C) -> (B//fold, fold*C) is the same linear layout: a free
    # view, no HBM copy. Lane-dense (last dim 128) when fold > 1.
    xf = x.reshape(B // fold, C * fold)
    out = se_block_prepared(xf, w1t, b1r, w2t, b2r, tb=tb,
                            core_parallel=core_parallel)
    return out.reshape(B, C)


def reference(x, w1, b1, w2, b2):
    h = jnp.maximum(x @ w1.T + b1, 0.0)
    gate = jax.nn.sigmoid(h @ w2.T + b2)
    return x * gate


if __name__ == "__main__":
    # SEBlock(in_channels=64, reduction=16) -> hidden = 4.
    B, C, red = 20, 64, 16
    H = C // red

    key = jax.random.PRNGKey(0)
    kx, k1, k2, k3, k4 = jax.random.split(key, 5)

    x = jax.random.normal(kx, (B, C), dtype=jnp.float32)
    # Deterministic synthetic parameter init (uniform, PyTorch-default scale).
    bound1 = 1.0 / (C ** 0.5)
    bound2 = 1.0 / (H ** 0.5)
    w1 = jax.random.uniform(k1, (H, C), minval=-bound1, maxval=bound1,
                            dtype=jnp.float32)
    b1 = jax.random.uniform(k2, (H,), minval=-bound1, maxval=bound1,
                            dtype=jnp.float32)
    w2 = jax.random.uniform(k3, (C, H), minval=-bound2, maxval=bound2,
                            dtype=jnp.float32)
    b2 = jax.random.uniform(k4, (C,), minval=-bound2, maxval=bound2,
                            dtype=jnp.float32)

    ref = reference(x, w1, b1, w2, b2)

    # Case 1: default byte-budgeted tile, lane-dense folded path
    # (B=20 even, C=64 -> fold=2 -> last dim 128, single partial block).
    out_default = se_block(x, w1, b1, w2, b2)
    jax.block_until_ready(out_default)
    assert jnp.allclose(out_default, ref, atol=1e-5, rtol=1e-5), \
        "mismatch vs reference (default tile, folded)"

    # Case 2: small explicit tile -> multi-step grid + partial last block.
    out_tiled = se_block(x, w1, b1, w2, b2, tb=8)
    jax.block_until_ready(out_tiled)
    assert jnp.allclose(out_tiled, ref, atol=1e-5, rtol=1e-5), \
        "mismatch vs reference (tiled, partial block)"

    # Case 3: odd batch -> fold falls back to 1 (block last dim = full C=64).
    x_odd = x[:7]
    out_odd = se_block(x_odd, w1, b1, w2, b2)
    jax.block_until_ready(out_odd)
    assert jnp.allclose(out_odd, reference(x_odd, w1, b1, w2, b2),
                        atol=1e-5, rtol=1e-5), \
        "mismatch vs reference (unfolded fallback)"

    print("KERNEL_OK")
</pallas_src>

<mosaic_0001>
module attributes {stable_mosaic.version = 11 : i64} {
  func.func @_se_kernel(%arg0: i32, %arg1: memref<16x128xf32, #tpu.memory_space<vmem>>, %arg2: memref<128x8xf32, #tpu.memory_space<vmem>>, %arg3: memref<1x8xf32, #tpu.memory_space<vmem>>, %arg4: memref<8x128xf32, #tpu.memory_space<vmem>>, %arg5: memref<1x128xf32, #tpu.memory_space<vmem>>, %arg6: memref<16x128xf32, #tpu.memory_space<vmem>>) attributes {dimension_semantics = [#tpu.dimension_semantics<parallel>], iteration_bounds = array<i64: 1>, scalar_prefetch = 0 : i64, scratch_operands = 0 : i64, tpu.core_type = #tpu.core_type<tc>, window_params = [{transform_indices = @transform_0, window_bounds = array<i64: 16, 128>}, {pipeline_mode = #tpu.pipeline_mode<synchronous>, transform_indices = @transform_1, window_bounds = array<i64: 128, 8>}, {pipeline_mode = #tpu.pipeline_mode<synchronous>, transform_indices = @transform_2, window_bounds = array<i64: 1, 8>}, {pipeline_mode = #tpu.pipeline_mode<synchronous>, transform_indices = @transform_3, window_bounds = array<i64: 8, 128>}, {pipeline_mode = #tpu.pipeline_mode<synchronous>, transform_indices = @transform_4, window_bounds = array<i64: 1, 128>}, {transform_indices = @transform_5, window_bounds = array<i64: 16, 128>}]} {
    %c0 = arith.constant 0 : index
    %c0_0 = arith.constant 0 : index
    %0 = vector.load %arg1[%c0, %c0_0] : memref<16x128xf32, #tpu.memory_space<vmem>>, vector<16x128xf32>
    %c0_1 = arith.constant 0 : index
    %c0_2 = arith.constant 0 : index
    %1 = vector.load %arg2[%c0_1, %c0_2] : memref<128x8xf32, #tpu.memory_space<vmem>>, vector<128x8xf32>
    %cst = arith.constant dense<0.000000e+00> : vector<16x8xf32>
    %2 = tpu.matmul %0, %1, %cst {dimension_numbers = #tpu.dot_dimension_numbers<[1], [0], [0], [1], [0, 0, 1, 1], [], []>} : vector<16x128xf32>, vector<128x8xf32>, vector<16x8xf32> -> vector<16x8xf32>
    %c0_3 = arith.constant 0 : index
    %c0_4 = arith.constant 0 : index
    %3 = vector.load %arg3[%c0_3, %c0_4] : memref<1x8xf32, #tpu.memory_space<vmem>>, vector<1x8xf32>
    %4 = vector.broadcast %3 : vector<1x8xf32> to vector<16x8xf32>
    %5 = arith.addf %2, %4 : vector<16x8xf32>
    %cst_5 = arith.constant 0.000000e+00 : f32
    %6 = vector.broadcast %cst_5 : f32 to vector<16x8xf32>
    %7 = arith.maximumf %5, %6 : vector<16x8xf32>
    %c0_6 = arith.constant 0 : index
    %c0_7 = arith.constant 0 : index
    %8 = vector.load %arg4[%c0_6, %c0_7] : memref<8x128xf32, #tpu.memory_space<vmem>>, vector<8x128xf32>
    %cst_8 = arith.constant dense<0.000000e+00> : vector<16x128xf32>
    %9 = tpu.matmul %7, %8, %cst_8 {dimension_numbers = #tpu.dot_dimension_numbers<[1], [0], [0], [1], [0, 0, 1, 1], [], []>} : vector<16x8xf32>, vector<8x128xf32>, vector<16x128xf32> -> vector<16x128xf32>
    %c0_9 = arith.constant 0 : index
    %c0_10 = arith.constant 0 : index
    %10 = vector.load %arg5[%c0_9, %c0_10] : memref<1x128xf32, #tpu.memory_space<vmem>>, vector<1x128xf32>
    %11 = vector.broadcast %10 : vector<1x128xf32> to vector<16x128xf32>
    %12 = arith.addf %9, %11 : vector<16x128xf32>
    %cst_11 = arith.constant 5.000000e-01 : f32
    %13 = vector.broadcast %cst_11 : f32 to vector<16x128xf32>
    %14 = arith.mulf %13, %12 : vector<16x128xf32>
    %15 = math.tanh %14 : vector<16x128xf32>
    %cst_12 = arith.constant 5.000000e-01 : f32
    %16 = vector.broadcast %cst_12 : f32 to vector<16x128xf32>
    %17 = arith.mulf %16, %15 : vector<16x128xf32>
    %cst_13 = arith.constant 5.000000e-01 : f32
    %18 = vector.broadcast %cst_13 : f32 to vector<16x128xf32>
    %19 = arith.addf %17, %18 : vector<16x128xf32>
    %20 = arith.mulf %0, %19 : vector<16x128xf32>
    %c0_14 = arith.constant 0 : index
    %c0_15 = arith.constant 0 : index
    %21 = vector.load %arg6[%c0_14, %c0_15] : memref<16x128xf32, #tpu.memory_space<vmem>>, vector<16x128xf32>
    tpu.vector_store %arg6[%c0_14, %c0_15], %20 {strides = array<i32>} : memref<16x128xf32, #tpu.memory_space<vmem>>, vector<16x128xf32>,
    return
  }
  func.func @transform_0(%arg0: i32) -> (i32, i32) {
    %c0_i32 = arith.constant 0 : i32
    %c0_i32_0 = arith.constant 0 : i32
    return %arg0, %c0_i32 : i32, i32
  }
  func.func @transform_1(%arg0: i32) -> (i32, i32) {
    %c0_i32 = arith.constant 0 : i32
    %c0_i32_0 = arith.constant 0 : i32
    %c0_i32_1 = arith.constant 0 : i32
    return %c0_i32, %c0_i32_0 : i32, i32
  }
  func.func @transform_2(%arg0: i32) -> (i32, i32) {
    %c0_i32 = arith.constant 0 : i32
    %c0_i32_0 = arith.constant 0 : i32
    %c0_i32_1 = arith.constant 0 : i32
    return %c0_i32, %c0_i32_0 : i32, i32
  }
  func.func @transform_3(%arg0: i32) -> (i32, i32) {
    %c0_i32 = arith.constant 0 : i32
    %c0_i32_0 = arith.constant 0 : i32
    %c0_i32_1 = arith.constant 0 : i32
    return %c0_i32, %c0_i32_0 : i32, i32
  }
  func.func @transform_4(%arg0: i32) -> (i32, i32) {
    %c0_i32 = arith.constant 0 : i32
    %c0_i32_0 = arith.constant 0 : i32
    %c0_i32_1 = arith.constant 0 : i32
    return %c0_i32, %c0_i32_0 : i32, i32
  }
  func.func @transform_5(%arg0: i32) -> (i32, i32) {
    %c0_i32 = arith.constant 0 : i32
    %c0_i32_0 = arith.constant 0 : i32
    return %arg0, %c0_i32 : i32, i32
  }
}

</mosaic_0001>

<llo_original>
// kernel: tpu_custom_call.1
$region0: #{tpu_custom_call.1}
  #allocation0 [shape = 'u32[]', space=smem, size = 0x4, offset = 0x4, fixed_abs, tag = 'smem constant byte address 0x4 - core index']
  #allocation1 [shape = 'u32[72,128]{1,0:T(1,128)}', space=vmem, size = 0x9000, scoped, tag = 'internal scratch']
  %s0 = inlined_call_operand.vmem [shape: f32[10,128], index: 0, kind: input, shape index: {}]
  %s1 = inlined_call_operand.vmem [shape: f32[128,8], index: 1, kind: input, shape index: {}]
  %s2 = inlined_call_operand.vmem [shape: f32[1,8], index: 2, kind: input, shape index: {}]
  %s3 = inlined_call_operand.vmem [shape: f32[8,128], index: 3, kind: input, shape index: {}]
  %s4 = inlined_call_operand.vmem [shape: f32[1,128], index: 4, kind: input, shape index: {}]
  %s5 = inlined_call_operand.hbm [shape: f32[10,128], index: 5, kind: output, shape index: {}]
  %s6 = sld [smem:[#allocation0]]
  $region30: #{tpu_custom_call.1} parent=0
    _
  %s8 = ssub.s32 1, %s6
  %s9 = scalar_select 0, %s8, %s6
  $region1: #{tpu_custom_call.1} parent=0
    #allocation2 [shape = 'u8[8192]{0}', space=vmem, size = 0x2000, scoped, tag = 'output window, operand 0, single buffered']
    #allocation3 [shape = 's32[1]{0}', space=sflag, size = 0x4, scoped, tag = 'scoped memory for tpu_custom_call.1']
    %10 = vsyncpa [#allocation3], 0
    // Predicated region
    $region2: #{tpu_custom_call.1} parent=1 // pred_check
      _
    $region3: #{tpu_custom_call.1} parent=1 // pred_check_branch
      %12 = sbr.rel (0) target = $region5
    $region4: #{tpu_custom_call.1} parent=1 // pred_region
      _
    $region5: #{tpu_custom_call.1} parent=1 // pred_fallthru
      _
    // Predicated region
    $region6: #{tpu_custom_call.1} parent=1 // pred_check
      _
    $region7: #{tpu_custom_call.1} parent=1 // pred_check_branch
      %14 = sbr.rel (0) target = $region9
    $region8: #{tpu_custom_call.1} parent=1 // pred_region
      _
    $region9: #{tpu_custom_call.1} parent=1 // pred_fallthru
      _
    // Predicated region
    $region10: #{tpu_custom_call.1} parent=1 // pred_check
      _
    $region11: #{tpu_custom_call.1} parent=1 // pred_check_branch
      %16 = sbr.rel (0) target = $region13
    $region12: #{tpu_custom_call.1} parent=1 // pred_region
      _
    $region13: #{tpu_custom_call.1} parent=1 // pred_fallthru
      _
    // Predicated region
    $region14: #{tpu_custom_call.1} parent=1 // pred_check
      _
    $region15: #{tpu_custom_call.1} parent=1 // pred_check_branch
      %18 = sbr.rel (0) target = $region17
    $region16: #{tpu_custom_call.1} parent=1 // pred_region
      _
    $region17: #{tpu_custom_call.1} parent=1 // pred_fallthru
      _
    // Predicated region
    $region18: #{tpu_custom_call.1} parent=1 // pred_check
      _
    $region19: #{tpu_custom_call.1} parent=1 // pred_check_branch
      %20 = sbr.rel (0) target = $region21
    $region20: #{tpu_custom_call.1} parent=1 // pred_region
      _
    $region21: #{tpu_custom_call.1} parent=1 // pred_fallthru
      _
    %v21 = vld [vmem:[%s0] sm:$0xff]
    %v22 = vld [vmem:[%s0 + $0x8] sm:$0xff]
    %v23 = vld [vmem:[%s1] sm:$0xff]
    %v24 = vld [vmem:[%s1 + $0x8] sm:$0xff]
    %v25 = vld [vmem:[%s1 + $0x10] sm:$0xff]
    %v26 = vld [vmem:[%s1 + $0x18] sm:$0xff]
    %v27 = vld [vmem:[%s1 + $0x20] sm:$0xff]
    %v28 = vld [vmem:[%s1 + $0x28] sm:$0xff]
    %v29 = vld [vmem:[%s1 + $0x30] sm:$0xff]
    %v30 = vld [vmem:[%s1 + $0x38] sm:$0xff]
    %v31 = vld [vmem:[%s1 + $0x40] sm:$0xff]
    %v32 = vld [vmem:[%s1 + $0x48] sm:$0xff]
    %v33 = vld [vmem:[%s1 + $0x50] sm:$0xff]
    %v34 = vld [vmem:[%s1 + $0x58] sm:$0xff]
    %v35 = vld [vmem:[%s1 + $0x60] sm:$0xff]
    %v36 = vld [vmem:[%s1 + $0x68] sm:$0xff]
    %v37 = vld [vmem:[%s1 + $0x70] sm:$0xff]
    %v38 = vld [vmem:[%s1 + $0x78] sm:$0xff]
    %v39 = vld [vmem:[%s2] sm:$0x1]
    %v41 = vperm.slane %v39, 0
    %43 = vmatpush.msra.mxu0 %v38
    %44 = vmatpush.msra.mxu0 %v37
    %45 = vmatpush.msra.mxu0 %v36
    %46 = vmatpush.msra.mxu0 %v35
    %47 = vmatpush.msra.mxu0 %v34
    %48 = vmatpush.msra.mxu0 %v33
    %49 = vmatpush.msra.mxu0 %v32
    %50 = vmatpush.msra.mxu0 %v31
    %51 = vmatpush.msra.mxu0 %v30
    %52 = vmatpush.msra.mxu0 %v29
    %53 = vmatpush.msra.mxu0 %v28
    %54 = vmatpush.msra.mxu0 %v27
    %55 = vmatpush.msra.mxu0 %v26
    %56 = vmatpush.msra.mxu0 %v25
    %57 = vmatpush.msra.mxu0 %v24
    %58 = vmatpush.msra.mxu0 %v23
    %59 = vmatmul.f32.gmra.mxu0 %v21
    %v60 = vpop.f32.mrf.mxu0
    %v61 = vadd.f32 %v41, %v60
    %62 = vmatmul.f32.gmra.mxu0 %v22
    %v63 = vpop.f32.mrf.mxu0
    %v64 = vadd.f32 %v41, %v63
    %65 = vdwg.mxu0
    %v66 = vmax.f32 %v61, 0.0
    %v67 = vmax.f32 %v64, 0.0
    %v68 = vld [vmem:[%s3] sm:$0xff]
    %v69 = vld [vmem:[%s4] sm:$0x1]
    %v71 = vperm.slane %v69, 0
    %vm73 = vcmask 64512
    %v75 = vsel %vm73, %v66, 0
    %v78 = vsel %vm73, %v67, 0
    %80 = vmatpush.msra.mxu0 0.0
    %81 = vmatpush.msra.mxu0 0.0
    %82 = vmatpush.msra.mxu0 0.0
    %83 = vmatpush.msra.mxu0 0.0
    %84 = vmatpush.msra.mxu0 0.0
    %85 = vmatpush.msra.mxu0 0.0
    %86 = vmatpush.msra.mxu0 0.0
    %87 = vmatpush.msra.mxu0 0.0
    %88 = vmatpush.msra.mxu0 0.0
    %89 = vmatpush.msra.mxu0 0.0
    %90 = vmatpush.msra.mxu0 0.0
    %91 = vmatpush.msra.mxu0 0.0
    %92 = vmatpush.msra.mxu0 0.0
    %93 = vmatpush.msra.mxu0 0.0
    %94 = vmatpush.msra.mxu0 0.0
    %95 = vmatpush.msra.mxu0 %v68
    %96 = vmatmul.f32.gmra.mxu0 %v75
    %v97 = vpop.f32.mrf.mxu0
    %v98 = vadd.f32 %v71, %v97
    %99 = vmatmul.f32.gmra.mxu0 %v78
    %v100 = vpop.f32.mrf.mxu0
    %v101 = vadd.f32 %v71, %v100
    %102 = vdwg.mxu0
    %v103 = vmul.f32 %v98, 0.5
    %v104 = vmul.f32 %v101, 0.5
    %v105 = vtanh.pop %v103
    %v106 = vtanh.pop %v104
    %v107 = vmul.f32 %v105, 0.5
    %v108 = vmul.f32 %v106, 0.5
    %v109 = vadd.f32 %v107, 0.5
    %v110 = vadd.f32 %v108, 0.5
    %v111 = vmul.f32 %v21, %v109
    %v112 = vmul.f32 %v22, %v110
    %113 = vst [vmem:[#allocation2] sm:$0xff] %v111
    %114 = vst [vmem:[#allocation2 + $0x8] sm:$0xff] %v112
    // Predicated region
    $region22: #{tpu_custom_call.1} parent=1 // pred_check
      _
    $region23: #{tpu_custom_call.1} parent=1 // pred_check_branch
      %116 = sbr.rel (0) target = $region25
    $region24: #{tpu_custom_call.1} parent=1 // pred_region
      %118 = vsyncadd [#allocation3], 0
      %s119 = sshll.u32 [#allocation2], 4
      %s120 = int_to_ptr.vmem [resolvable:$true] %s119
      %s121 = sshll.u32 %s5, 4
      %s122 = int_to_ptr.hbm [resolvable:$true] %s121
      %127 = dma.vmem_to_hbm [thread:$0]  %s120, 256, %s122, [#allocation3], 128, 128, 8
    $region25: #{tpu_custom_call.1} parent=1 // pred_fallthru
      _
    // Predicated region
    $region26: #{tpu_custom_call.1} parent=1 // pred_check
      _
    $region27: #{tpu_custom_call.1} parent=1 // pred_check_branch
      %129 = sbr.rel (0) target = $region29
    $region28: #{tpu_custom_call.1} parent=1 // pred_region
      %131 = dma.done [#allocation3], 256
    $region29: #{tpu_custom_call.1} parent=1 // pred_fallthru
      _
    %132 = vsyncpa [#allocation3], 1

</llo_original>
